<compile_context>
chip_gen: v7x
topology: tpu7x:2x2x1
jax: 0.10.0
libtpu: 0.0.40
codegen_flags: <defaults>
</compile_context>

<pallas_src>
import functools

import jax
import jax.numpy as jnp
from jax.experimental import pallas as pl
from jax.experimental.pallas import tpu as pltpu


def _cond_broadcast_kernel(imgs_ref, cond_ref, out_ref, *, c_img):
    # imgs_ref: (C_img, TL)         spatial tile of one batch element
    # cond_ref: (C_cond, 1)         conditioning vector of that batch element
    # out_ref : (C_img + C_cond, TL)
    out_ref[:c_img, :] = imgs_ref[...].astype(out_ref.dtype)
    c_cond = cond_ref.shape[0]
    tl = out_ref.shape[-1]
    out_ref[c_img:, :] = jnp.broadcast_to(
        cond_ref[...], (c_cond, tl)).astype(out_ref.dtype)


def _lane_tile(hw, c_total, dtype_bytes, max_block_bytes=2 << 20):
    """Largest lane tile (multiple of 128, or the full H*W) keeping a single
    output block under `max_block_bytes`, so the double-buffered (in + out)
    blocks fit inside the default scoped-VMEM budget on v5e / v6e / v7x
    without raising vmem_limit_bytes."""
    if c_total * hw * dtype_bytes <= max_block_bytes:
        return int(hw)
    tl = (max_block_bytes // (c_total * dtype_bytes)) // 128 * 128
    return int(max(128, min(tl, hw)))


def cond_broadcast_d(imgs, cond):
    """imgs: (B, C_img, sz, sz), cond: (B, C_cond) -> (B, C_img+C_cond, sz, sz)."""
    B, C_img, H, W = imgs.shape
    Bc, C_cond = cond.shape
    assert Bc == B, "batch mismatch between imgs and cond"
    HW = H * W
    C_total = C_img + C_cond

    # --- glue reshapes (plain JAX metadata ops), no compute ---
    imgs_f = imgs.reshape(B, C_img, HW)
    cond_f = cond.astype(imgs.dtype).reshape(B, C_cond, 1)

    tl = _lane_tile(HW, C_total, jnp.dtype(imgs.dtype).itemsize)
    grid = (B, pl.cdiv(HW, tl))

    out = pl.pallas_call(
        functools.partial(_cond_broadcast_kernel, c_img=C_img),
        out_shape=jax.ShapeDtypeStruct((B, C_total, HW), imgs.dtype),
        grid=grid,
        in_specs=[
            # imgs: a new spatial tile per lane-grid step (double-buffered).
            pl.BlockSpec((None, C_img, tl), lambda b, l: (b, 0, l)),
            # cond: constant block index along the lane axis -> stays resident.
            pl.BlockSpec((None, C_cond, 1), lambda b, l: (b, 0, 0)),
        ],
        out_specs=pl.BlockSpec((None, C_total, tl), lambda b, l: (b, 0, l)),
        compiler_params=pltpu.CompilerParams(
            dimension_semantics=("parallel", "parallel")),
    )(imgs_f, cond_f)
    return out.reshape(B, C_total, H, W)


def _reference(imgs, cond):
    """Pure-JAX reference mirroring the PyTorch module."""
    B, C_img, H, W = imgs.shape
    C_cond = cond.shape[1]
    cond_b = jnp.broadcast_to(cond[:, :, None, None], (B, C_cond, H, W))
    return jnp.concatenate([imgs, cond_b.astype(imgs.dtype)], axis=1)


if __name__ == "__main__":
    B, C_img, C_cond, SZ = 2, 4, 4, 16

    key = jax.random.PRNGKey(0)
    k1, k2 = jax.random.split(key)
    imgs = jax.random.normal(k1, (B, C_img, SZ, SZ), dtype=jnp.float32)
    cond = jax.random.normal(k2, (B, C_cond), dtype=jnp.float32)

    out = cond_broadcast_d(imgs, cond)
    out = jax.block_until_ready(out)

    ref = _reference(imgs, cond)
    assert out.shape == (B, C_img + C_cond, SZ, SZ)
    assert jnp.allclose(out, ref), "mismatch vs reference"

    print("KERNEL_OK")
</pallas_src>

<mosaic_0001>
module attributes {stable_mosaic.version = 11 : i64} {
  func.func @_cond_broadcast_kernel(%arg0: i32, %arg1: i32, %arg2: memref<1x4x256xf32, #tpu.memory_space<vmem>>, %arg3: memref<1x4x1xf32, #tpu.memory_space<vmem>>, %arg4: memref<1x8x256xf32, #tpu.memory_space<vmem>>) attributes {dimension_semantics = [#tpu.dimension_semantics<parallel>, #tpu.dimension_semantics<parallel>], iteration_bounds = array<i64: 2, 1>, scalar_prefetch = 0 : i64, scratch_operands = 0 : i64, tpu.core_type = #tpu.core_type<tc>, window_params = [{transform_indices = @transform_0, window_bounds = array<i64: 1, 4, 256>}, {transform_indices = @transform_1, window_bounds = array<i64: 1, 4, 1>}, {transform_indices = @transform_2, window_bounds = array<i64: 1, 8, 256>}]} {
    %c0 = arith.constant 0 : index
    %c0_0 = arith.constant 0 : index
    %c0_1 = arith.constant 0 : index
    %0 = vector.load %arg2[%c0, %c0_0, %c0_1] : memref<1x4x256xf32, #tpu.memory_space<vmem>>, vector<1x4x256xf32>
    %1 = vector.shape_cast %0 : vector<1x4x256xf32> to vector<4x256xf32>
    %c0_2 = arith.constant 0 : index
    %c0_3 = arith.constant 0 : index
    %c0_4 = arith.constant 0 : index
    %2 = vector.load %arg4[%c0_2, %c0_3, %c0_4] : memref<1x8x256xf32, #tpu.memory_space<vmem>>, vector<1x4x256xf32>
    %3 = vector.shape_cast %2 : vector<1x4x256xf32> to vector<4x256xf32>
    %4 = vector.shape_cast %1 : vector<4x256xf32> to vector<1x4x256xf32>
    tpu.vector_store %arg4[%c0_2, %c0_3, %c0_4], %4 {strides = array<i32>} : memref<1x8x256xf32, #tpu.memory_space<vmem>>, vector<1x4x256xf32>,
    %c0_5 = arith.constant 0 : index
    %c0_6 = arith.constant 0 : index
    %c0_7 = arith.constant 0 : index
    %5 = vector.load %arg3[%c0_5, %c0_6, %c0_7] : memref<1x4x1xf32, #tpu.memory_space<vmem>>, vector<1x4x1xf32>
    %6 = vector.shape_cast %5 : vector<1x4x1xf32> to vector<4x1xf32>
    %7 = vector.shape_cast %6 : vector<4x1xf32> to vector<4x1xf32>
    %8 = vector.broadcast %7 : vector<4x1xf32> to vector<4x256xf32>
    %c0_8 = arith.constant 0 : index
    %c4 = arith.constant 4 : index
    %c0_9 = arith.constant 0 : index
    %9 = vector.load %arg4[%c0_8, %c4, %c0_9] : memref<1x8x256xf32, #tpu.memory_space<vmem>>, vector<1x4x256xf32>
    %10 = vector.shape_cast %9 : vector<1x4x256xf32> to vector<4x256xf32>
    %11 = vector.shape_cast %8 : vector<4x256xf32> to vector<1x4x256xf32>
    tpu.vector_store %arg4[%c0_8, %c4, %c0_9], %11 {strides = array<i32>} : memref<1x8x256xf32, #tpu.memory_space<vmem>>, vector<1x4x256xf32>,
    return
  }
  func.func @transform_0(%arg0: i32, %arg1: i32) -> (i32, i32, i32) {
    %c0_i32 = arith.constant 0 : i32
    %c0_i32_0 = arith.constant 0 : i32
    return %arg0, %c0_i32, %arg1 : i32, i32, i32
  }
  func.func @transform_1(%arg0: i32, %arg1: i32) -> (i32, i32, i32) {
    %c0_i32 = arith.constant 0 : i32
    %c0_i32_0 = arith.constant 0 : i32
    %c0_i32_1 = arith.constant 0 : i32
    return %arg0, %c0_i32, %c0_i32_0 : i32, i32, i32
  }
  func.func @transform_2(%arg0: i32, %arg1: i32) -> (i32, i32, i32) {
    %c0_i32 = arith.constant 0 : i32
    %c0_i32_0 = arith.constant 0 : i32
    return %arg0, %c0_i32, %arg1 : i32, i32, i32
  }
}

</mosaic_0001>

<llo_original>
// kernel: tpu_custom_call.1
$region0: #{tpu_custom_call.1}
  #allocation0 [shape = 'u32[]', space=smem, size = 0x4, offset = 0x4, fixed_abs, tag = 'smem constant byte address 0x4 - core index']
  #allocation1 [shape = 'u32[144,128]{1,0:T(1,128)}', space=vmem, size = 0x12000, scoped, tag = 'internal scratch']
  %s0 = inlined_call_operand.hbm [shape: f32[2,4,256], index: 0, kind: input, shape index: {}]
  %s1 = inlined_call_operand.vmem [shape: f32[2,4,1], index: 1, kind: input, shape index: {}]
  %s2 = inlined_call_operand.hbm [shape: f32[2,8,256], index: 2, kind: output, shape index: {}]
  %s3 = sld [smem:[#allocation0]]
  $region45: #{tpu_custom_call.1} parent=0
    _
  %s5 = ssub.s32 1, %s3
  %s6 = scalar_select 0, %s5, %s3
  $region1: #{tpu_custom_call.1} parent=0
    #allocation2 [shape = 'u8[8192]{0}', space=vmem, size = 0x2000, scoped, tag = 'input window, operand 0']
    #allocation3 [shape = 's32[2]{0}', space=sflag, size = 0x8, scoped, tag = 'scoped memory for tpu_custom_call.1']
    #allocation4 [shape = 's32[2]{0}', space=sflag, size = 0x8, scoped, tag = 'scoped memory for tpu_custom_call.1']
    #allocation5 [shape = 'u8[16384]{0}', space=vmem, size = 0x4000, scoped, tag = 'output window, operand 0']
    %7 = vsyncpa [#allocation3], 0
    %s8 = scalar_lea.sflag [#allocation3], 1
    %9 = vsyncpa %s8, 0
    %10 = vsyncpa [#allocation4], 0
    %s11 = scalar_lea.sflag [#allocation4], 1
    %12 = vsyncpa %s11, 0
    loop: start=0, step=1, limit=4
    $region2: #{tpu_custom_call.1} parent=1 // loop_pre_header
      _
    $region3: #{tpu_custom_call.1} parent=1 // loop_header
      %s14 = sphi 0, %s18
      %p15 = scmp.ge.s32.totalorder %s14, 4
      %s21 = sphi 0, %s33
      %s22 = sphi 0, %s29
      %s23 = sphi 0, %s21
      %s24 = sphi 0, %s22
      %s25 = sphi 0, %s23
      %s26 = sphi 0, %s24
      %s38 = sphi 0, %s40
      %s41 = sphi 0, %s38
      %s42 = sphi 0, %s41
      %s58 = sphi 0, %s42
      %s64 = sphi 0, %s66
      %s67 = sphi 0, %s64
      %s68 = sphi 0, %s67
      %s84 = sphi 0, %s68
      %s92 = sphi 0, %s94
      %s95 = sphi 0, %s92
      %s96 = sphi 0, %s95
      %s112 = sphi 0, %s96
    $region4: #{tpu_custom_call.1} parent=1 // loop_header_branch
      %17 = sbr.rel (%p15) target = $region8
    $region5: #{tpu_custom_call.1} parent=1 // loop_body
      %s19 = ssub.s32 %s14, 1
      %s20 = ssub.s32 %s14, 2
      %s27 = sadd.s32 1, %s22
      %p28 = scmp.ge.s32.totalorder %s27, 1
      %s29 = scalar_select %p28, 0, %s27
      %s30 = sadd.s32 1, %s21
      %s31 = scalar_select %p28, %s30, %s21
      %p32 = scmp.ge.s32.totalorder %s31, 2
      %s33 = scalar_select %p32, 0, %s31
      %s34 = ssub.s32 %s21, %s33
      %s35 = ssub.s32 %s22, %s29
      %s36 = sor.u32 %s34, %s35
      %p37 = scmp.eq.s32.totalorder %s36, 0
      %s39 = sadd.s32 %s38, 1
      %s40 = scalar_select %p37, %s38, %s39
      %p43 = pneg %p37
      %p44 = scmp.eq.s32.totalorder %s14, 1
      %p45 = por %p43, %p44
      %p46 = scmp.ne.s32.totalorder %s38, %s41
      %p47 = scmp.eq.s32.totalorder %s14, 0
      %p48 = por %p46, %p47
      %p49 = scmp.ne.s32.totalorder %s38, %s41
      %p50 = scmp.eq.s32.totalorder %s19, 1
      %p51 = por %p49, %p50
      %p52 = scmp.ne.s32.totalorder %s41, %s42
      %p53 = scmp.eq.s32.totalorder %s19, 0
      %p54 = por %p52, %p53
      %p55 = scmp.ne.s32.totalorder %s41, %s42
      %p56 = scmp.eq.s32.totalorder %s20, 1
      %p57 = por %p55, %p56
      %p59 = scmp.ne.s32.totalorder %s42, %s58
      %p60 = scmp.eq.s32.totalorder %s20, 0
      %p61 = por %p59, %p60
      %s62 = ssub.s32 %s21, %s33
      %p63 = scmp.eq.s32.totalorder %s62, 0
      %s65 = sadd.s32 %s64, 1
      %s66 = scalar_select %p63, %s64, %s65
      %p69 = pneg %p63
      %p70 = scmp.eq.s32.totalorder %s14, 1
      %p71 = por %p69, %p70
      %p72 = scmp.ne.s32.totalorder %s64, %s67
      %p73 = scmp.eq.s32.totalorder %s14, 0
      %p74 = por %p72, %p73
      %p75 = scmp.ne.s32.totalorder %s64, %s67
      %p76 = scmp.eq.s32.totalorder %s19, 1
      %p77 = por %p75, %p76
      %p78 = scmp.ne.s32.totalorder %s67, %s68
      %p79 = scmp.eq.s32.totalorder %s19, 0
      %p80 = por %p78, %p79
      %p81 = scmp.ne.s32.totalorder %s67, %s68
      %p82 = scmp.eq.s32.totalorder %s20, 1
      %p83 = por %p81, %p82
      %p85 = scmp.ne.s32.totalorder %s68, %s84
      %p86 = scmp.eq.s32.totalorder %s20, 0
      %p87 = por %p85, %p86
      %s88 = ssub.s32 %s21, %s33
      %s89 = ssub.s32 %s22, %s29
      %s90 = sor.u32 %s88, %s89
      %p91 = scmp.eq.s32.totalorder %s90, 0
      %s93 = sadd.s32 %s92, 1
      %s94 = scalar_select %p91, %s92, %s93
      %p97 = pneg %p91
      %p98 = scmp.eq.s32.totalorder %s14, 1
      %p99 = por %p97, %p98
      %p100 = scmp.ne.s32.totalorder %s92, %s95
      %p101 = scmp.eq.s32.totalorder %s14, 0
      %p102 = por %p100, %p101
      %p103 = scmp.ne.s32.totalorder %s92, %s95
      %p104 = scmp.eq.s32.totalorder %s19, 1
      %p105 = por %p103, %p104
      %p106 = scmp.ne.s32.totalorder %s95, %s96
      %p107 = scmp.eq.s32.totalorder %s19, 0
      %p108 = por %p106, %p107
      %p109 = scmp.ne.s32.totalorder %s95, %s96
      %p110 = scmp.eq.s32.totalorder %s20, 1
      %p111 = por %p109, %p110
      %p113 = scmp.ne.s32.totalorder %s96, %s112
      %p114 = scmp.eq.s32.totalorder %s20, 0
      %p115 = por %p113, %p114
      %p116 = scmp.le.s32.totalorder 1, %s14
      %p117 = scmp.lt.s32.totalorder %s14, 3
      %p118 = pnand %p116, %p117
      %p119 = pneg %p118
      // Predicated region
      $region9: #{tpu_custom_call.1} parent=5 // pred_check
        _
      $region10: #{tpu_custom_call.1} parent=5 // pred_check_branch
        %121 = sbr.rel (%p118) target = $region12
      $region11: #{tpu_custom_call.1} parent=5 // pred_region
        %s122 = ssub.s32 %s14, 1
      $region12: #{tpu_custom_call.1} parent=5 // pred_fallthru
        _
      %p123 = scmp.lt.s32.totalorder %s14, 2
      // Predicated region
      $region13: #{tpu_custom_call.1} parent=5 // pred_check
        %p124 = pneg %p123
      $region14: #{tpu_custom_call.1} parent=5 // pred_check_branch
        %126 = sbr.rel (%p124) target = $region16
      $region15: #{tpu_custom_call.1} parent=5 // pred_region
        // Predicated region
        $region17: #{tpu_custom_call.1} parent=15 // pred_check
          %p127 = pneg %p48
        $region18: #{tpu_custom_call.1} parent=15 // pred_check_branch
          %129 = sbr.rel (%p127) target = $region20
        $region19: #{tpu_custom_call.1} parent=15 // pred_region
          %s130 = sand.u32 %s38, 1
          %s131 = scalar_lea.sflag [#allocation3], %s130
          %s132 = sand.u32 %s38, 1
          %s133 = smul.addr %s132, 8
          %s134 = scalar_lea.vmem [#allocation2], %s133
          %s135 = smul.u32 2, %s22
          %s137 = ssub.s32 128, 128
          %138 = vsyncadd %s131, %s137
          %s139 = smul.addr %s21, 2
          %s140 = sadd.s32 %s135, %s139
          %s141 = smul.addr %s140, 64
          %s142 = scalar_lea.hbm %s0, %s141
          %s144 = sshll.u32 %s134, 4
          %s145 = int_to_ptr.vmem [resolvable:$true] %s144
          %147 = dma.hbm_to_vmem [thread:$0]  %s142, 128, %s145, %s131
        $region20: #{tpu_custom_call.1} parent=15 // pred_fallthru
          _
        // Predicated region
        $region21: #{tpu_custom_call.1} parent=15 // pred_check
          %p148 = pneg %p74
        $region22: #{tpu_custom_call.1} parent=15 // pred_check_branch
          %150 = sbr.rel (%p148) target = $region24
        $region23: #{tpu_custom_call.1} parent=15 // pred_region
          %p151 = scmp.lt.s32.totalorder %s21, 1
          %s152 = scalar_select %p151, %s21, 1
          %s153 = smul.addr %s152, 4
          %s154 = scalar_lea.vmem %s1, %s153
        $region24: #{tpu_custom_call.1} parent=15 // pred_fallthru
          _
      $region16: #{tpu_custom_call.1} parent=5 // pred_fallthru
        _
      %p155 = scmp.le.s32.totalorder 1, %s14
      %p156 = scmp.lt.s32.totalorder %s14, 3
      %p157 = pnand %p155, %p156
      %p158 = pneg %p157
      // Predicated region
      $region25: #{tpu_custom_call.1} parent=5 // pred_check
        _
      $region26: #{tpu_custom_call.1} parent=5 // pred_check_branch
        %160 = sbr.rel (%p157) target = $region28
      $region27: #{tpu_custom_call.1} parent=5 // pred_region
        %s161 = ssub.s32 %s14, 1
        %s162 = sand.u32 %s41, 1
        %s163 = scalar_lea.sflag [#allocation3], %s162
        %s164 = sand.u32 %s41, 1
        %s165 = smul.addr %s164, 8
        %s166 = scalar_lea.vmem [#allocation2], %s165
        // Predicated region
        $region29: #{tpu_custom_call.1} parent=27 // pred_check
          %p167 = pneg %p54
        $region30: #{tpu_custom_call.1} parent=27 // pred_check_branch
          %169 = sbr.rel (%p167) target = $region32
        $region31: #{tpu_custom_call.1} parent=27 // pred_region
          %170 = dma.done %s163, 128
        $region32: #{tpu_custom_call.1} parent=27 // pred_fallthru
          _
        %s171 = sand.u32 %s41, 1
        %s172 = scalar_lea.sflag [#allocation3], %s171
        %s173 = sand.u32 %s41, 1
        %s174 = smul.addr %s173, 8
        %s175 = scalar_lea.vmem [#allocation2], %s174
        %p176 = pneg %p54
        %p177 = pneg %p51
        %p178 = scmp.lt.s32.totalorder %s23, 1
        %s179 = scalar_select %p178, %s23, 1
        %s180 = smul.addr %s179, 4
        %s181 = scalar_lea.vmem %s1, %s180
        %p182 = pneg %p80
        %p183 = pneg %p77
        %p184 = pneg %p108
        %p185 = pneg %p105
        %s186 = sand.u32 %s95, 1
        %s187 = scalar_lea.sflag [#allocation4], %s186
        %s188 = sand.u32 %s95, 1
        %s189 = smul.addr %s188, 16
        %s190 = scalar_lea.vmem [#allocation5], %s189
        %s191 = smul.u32 2, %s24
        %p192 = scmp.lt.s32.totalorder %s23, 1
        %s193 = scalar_select %p192, %s23, 1
        %s194 = smul.addr %s193, 4
        %s195 = scalar_lea.vmem %s1, %s194
        %s196 = smul.u32 2, %s24
        %v197 = vld [vmem:[%s166] sm:$0xff]
        %v199 = vcombine.high %v197, %v197
        %201 = vst [vmem:[%s190] sm:$0xf] %v197
        %202 = vst [vmem:[%s190 + $0x8] sm:$0xf] %v199
        %v203 = vld [vmem:[%s195] sm:$0xf]
        %205 = vset.pattern.permute.xlu0 0
        %206 = vperm.xlu0 %205, %v203
        %v207 = vpop.permute.xlu0 %206
        %v208 = vrot.slane %v207, 4
        %210 = vst [vmem:[%s190] sm:$0xf0] %v208
        %211 = vst [vmem:[%s190 + $0x8] sm:$0xf0] %v208
        %s212 = sand.u32 %s95, 1
        %s213 = scalar_lea.sflag [#allocation4], %s212
        %s214 = sand.u32 %s95, 1
        %s215 = smul.addr %s214, 16
        %s216 = scalar_lea.vmem [#allocation5], %s215
        // Predicated region
        $region33: #{tpu_custom_call.1} parent=27 // pred_check
          %p217 = pneg %p105
        $region34: #{tpu_custom_call.1} parent=27 // pred_check_branch
          %219 = sbr.rel (%p217) target = $region36
        $region35: #{tpu_custom_call.1} parent=27 // pred_region
          %s220 = smul.u32 2, %s24
          %s222 = ssub.s32 256, 256
          %223 = vsyncadd %s213, %s222
          %s224 = smul.addr %s23, 2
          %s225 = sadd.s32 %s220, %s224
          %s226 = smul.addr %s225, 128
          %s227 = scalar_lea.hbm %s2, %s226
          %s229 = sshll.u32 %s216, 4
          %s230 = int_to_ptr.vmem [resolvable:$true] %s229
          %232 = dma.vmem_to_hbm [thread:$0]  %s230, 256, %s227, %s213
        $region36: #{tpu_custom_call.1} parent=27 // pred_fallthru
          _
      $region28: #{tpu_custom_call.1} parent=5 // pred_fallthru
        _
      %p233 = scmp.le.s32.totalorder 2, %s14
      // Predicated region
      $region37: #{tpu_custom_call.1} parent=5 // pred_check
        %p234 = pneg %p233
      $region38: #{tpu_custom_call.1} parent=5 // pred_check_branch
        %236 = sbr.rel (%p234) target = $region40
      $region39: #{tpu_custom_call.1} parent=5 // pred_region
        %s237 = ssub.s32 %s14, 2
        // Predicated region
        $region41: #{tpu_custom_call.1} parent=39 // pred_check
          %p238 = pneg %p111
        $region42: #{tpu_custom_call.1} parent=39 // pred_check_branch
          %240 = sbr.rel (%p238) target = $region44
        $region43: #{tpu_custom_call.1} parent=39 // pred_region
          %s241 = sand.u32 %s96, 1
          %s242 = scalar_lea.sflag [#allocation4], %s241
          %s243 = sand.u32 %s96, 1
          %s244 = smul.addr %s243, 16
          %s245 = scalar_lea.vmem [#allocation5], %s244
          %246 = dma.done %s242, 256
        $region44: #{tpu_custom_call.1} parent=39 // pred_fallthru
          _
      $region40: #{tpu_custom_call.1} parent=5 // pred_fallthru
        _
    $region6: #{tpu_custom_call.1} parent=1 // loop_footer
      %s18 = sadd.s32 1, %s14
    $region7: #{tpu_custom_call.1} parent=1 // loop_footer_branch
      %13 = sbr.rel target = $region3
    $region8: #{tpu_custom_call.1} parent=1 // loop_exit
      _
    %247 = vsyncpa [#allocation3], 1
    %s248 = scalar_lea.sflag [#allocation3], 1
    %249 = vsyncpa %s248, 1
    %250 = vsyncpa [#allocation4], 1
    %s251 = scalar_lea.sflag [#allocation4], 1
    %252 = vsyncpa %s251, 1

</llo_original>
